<compile_context>
chip_gen: v5e
topology: v5e:2x2
jax: 0.10.0
libtpu: 0.0.40
codegen_flags: <defaults>
</compile_context>

<pallas_src>
import functools

import jax
import jax.numpy as jnp
from jax import lax
from jax.experimental import pallas as pl
from jax.experimental.pallas import tpu as pltpu

_LANE = 128
_MAX_TB = 2048                       # rows per reduction grid step (1 MiB / operand / buffer)
_REDUCE_VMEM = 32 * 1024 * 1024
_CONV_VMEM = 48 * 1024 * 1024
_G1 = (0.05, 0.25, 0.4, 0.25, 0.05)  # 1-D gaussian taps of the torch EdgeLoss kernel


def _round_up(x, m):
    return ((x + m - 1) // m) * m


# ----------------------------------------------------------------------------
# Pallas kernel 1: batched pairwise reductions -> per pair [ sum((a-b)^2), sum|a-b| ]
# ----------------------------------------------------------------------------
def _multi_pair_kernel(nvalid_ref, a_ref, b_ref, o_ref, *, tb):
    g = pl.program_id(0)
    i = pl.program_id(1)

    @pl.when(i == 0)
    def _():
        o_ref[...] = jnp.zeros_like(o_ref)

    nv = nvalid_ref[g]
    start = i * (tb * _LANE)
    a = a_ref[...]                       # (1, tb, 128)
    b = b_ref[...]
    d = a - b
    dsq = d * d
    dab = jnp.abs(d)

    # Full tile: unmasked accumulate (no iota / compare / select on the hot path).
    @pl.when(start + tb * _LANE <= nv)
    def _():
        o_ref[:, 0:1, :] += jnp.sum(dsq, axis=1, keepdims=True)
        o_ref[:, 1:2, :] += jnp.sum(dab, axis=1, keepdims=True)

    # Boundary tile only: mask the tail.  Tiles fully past nv contribute nothing.
    @pl.when((start < nv) & (start + tb * _LANE > nv))
    def _():
        row = lax.broadcasted_iota(jnp.int32, d.shape, 1)
        lane = lax.broadcasted_iota(jnp.int32, d.shape, 2)
        m = (start + row * _LANE + lane) < nv
        o_ref[:, 0:1, :] += jnp.sum(jnp.where(m, dsq, 0.0), axis=1, keepdims=True)
        o_ref[:, 1:2, :] += jnp.sum(jnp.where(m, dab, 0.0), axis=1, keepdims=True)


def _multi_pair_sums(pairs):
    """One Pallas launch for a list of (a, b) pairs (arbitrary shapes).

    Returns (sums, counts): sums[g, 0] = sum((a-b)^2), sums[g, 1] = sum|a-b|,
    counts[g] = number of valid elements of pair g (Python ints).
    """
    nvals = [int(a.size) for a, _ in pairs]
    G = len(pairs)
    max_n = max(nvals)
    rows = pl.cdiv(max_n, _LANE)
    tb = min(_MAX_TB, _round_up(rows, 8))
    T = pl.cdiv(rows, tb)
    npad = T * tb * _LANE

    def prep(x, n):
        return jnp.pad(x.astype(jnp.float32).reshape(-1), (0, npad - n))

    A = jnp.stack([prep(a, n) for (a, _), n in zip(pairs, nvals)]).reshape(G, T * tb, _LANE)
    B = jnp.stack([prep(b, n) for (_, b), n in zip(pairs, nvals)]).reshape(G, T * tb, _LANE)
    nvalid = jnp.asarray(nvals, jnp.int32)

    out = pl.pallas_call(
        functools.partial(_multi_pair_kernel, tb=tb),
        out_shape=jax.ShapeDtypeStruct((G, 2, _LANE), jnp.float32),
        grid_spec=pltpu.PrefetchScalarGridSpec(
            num_scalar_prefetch=1,
            grid=(G, T),
            in_specs=[pl.BlockSpec((1, tb, _LANE), lambda g, i, nv: (g, i, 0)),
                      pl.BlockSpec((1, tb, _LANE), lambda g, i, nv: (g, i, 0))],
            out_specs=pl.BlockSpec((1, 2, _LANE), lambda g, i, nv: (g, 0, 0))),
        compiler_params=pltpu.CompilerParams(
            dimension_semantics=("parallel", "arbitrary"),
            vmem_limit_bytes=_REDUCE_VMEM),
    )(nvalid, A, B)
    sums = jnp.sum(out, axis=2)          # (G, 2)
    return sums, nvals


# ----------------------------------------------------------------------------
# Pallas kernel 2: contrast-preservation moments (per-channel std of padded dx)
# ----------------------------------------------------------------------------
def _contrast_kernel(x_ref, o_ref):
    x = x_ref[...]                       # (N, 1, H, W)  one channel, full batch
    # dx of the zero-padded channel, computed in-kernel:
    #   interior columns = x[..., w-1] - x[..., w];  boundary columns = -x[...,0] / +x[...,-1]
    dh = x[:, :, :, :-1] - x[:, :, :, 1:]
    left = x[:, :, :, 0:1]
    right = x[:, :, :, -1:]
    s = jnp.sum(dh) + jnp.sum(right) - jnp.sum(left)
    ss = jnp.sum(dh * dh) + jnp.sum(right * right) + jnp.sum(left * left)
    o_ref[:, 0:1, :] = jnp.broadcast_to(s, (1, 1, _LANE))
    o_ref[:, 1:2, :] = jnp.broadcast_to(ss, (1, 1, _LANE))


def _contrast_stds(tensors):
    """Per-channel unbiased std of F.conv2d(x_c, [[1,-1]], padding=1) for each tensor.

    tensors: list of (N, C, H, W) arrays (same shape).  Returns (len(tensors), C).
    No dx materialization, no NCHW->CNHW transpose, no spatial pad copy.
    """
    N, C, H, W = tensors[0].shape
    x = jnp.concatenate([t.astype(jnp.float32) for t in tensors], axis=1)   # (N, G, H, W)
    G = x.shape[1]
    out = pl.pallas_call(
        _contrast_kernel,
        out_shape=jax.ShapeDtypeStruct((G, 2, _LANE), jnp.float32),
        grid=(G,),
        in_specs=[pl.BlockSpec((N, 1, H, W), lambda g: (0, g, 0, 0))],
        out_specs=pl.BlockSpec((1, 2, _LANE), lambda g: (g, 0, 0)),
        compiler_params=pltpu.CompilerParams(
            dimension_semantics=("parallel",),
            vmem_limit_bytes=_REDUCE_VMEM),
    )(x)
    s = out[:, 0, 0]
    ss = out[:, 1, 0]
    n = jnp.float32(N * (H + 2) * (W + 1))          # dx domain includes the zero pad
    var = (ss - s * s / n) / (n - 1.0)              # torch.std (unbiased)
    stds = jnp.sqrt(jnp.maximum(var, 0.0))
    return stds.reshape(len(tensors), C)


# ----------------------------------------------------------------------------
# Pallas kernel 3: TV gradients of the illumination map (shifted diffs in-kernel)
# ----------------------------------------------------------------------------
def _tv_kernel(x_ref, o_ref):
    x = x_ref[...]                                   # (N, C, H, W)
    dh = jnp.abs(x[:, :, :, :-1] - x[:, :, :, 1:])
    dw = jnp.abs(x[:, :, :-1, :] - x[:, :, 1:, :])
    o_ref[0:1, :] = jnp.broadcast_to(jnp.sum(dh), (1, _LANE))
    o_ref[1:2, :] = jnp.broadcast_to(jnp.sum(dw), (1, _LANE))


def _tv_loss(L):
    N, C, H, W = L.shape
    out = pl.pallas_call(
        _tv_kernel,
        out_shape=jax.ShapeDtypeStruct((2, _LANE), jnp.float32),
        grid=(1,),
        in_specs=[pl.BlockSpec((N, C, H, W), lambda i: (0, 0, 0, 0))],
        out_specs=pl.BlockSpec((2, _LANE), lambda i: (0, 0)),
        compiler_params=pltpu.CompilerParams(
            dimension_semantics=("arbitrary",),
            vmem_limit_bytes=_REDUCE_VMEM),
    )(L.astype(jnp.float32))
    gh = out[0, 0] / (N * C * H * (W - 1))
    gw = out[1, 0] / (N * C * (H - 1) * W)
    return gh + gw


# ----------------------------------------------------------------------------
# Pallas kernel 4: VGG 3x3 conv as 9 shifted MXU matmuls (no im2col in HBM)
# ----------------------------------------------------------------------------
def _conv3x3_kernel(x_ref, w_ref, b_ref, o_ref, *, wp, relu):
    # x_ref: (1, (H+3)*(W+3), Cin) bf16 flattened zero-padded image rows
    # w_ref: (3, 3, Cin, tn) bf16 ;  b_ref: (1, tn) f32 ;  o_ref: (1, H*(W+3), tn)
    m = o_ref.shape[1]
    acc = jnp.zeros((m, o_ref.shape[2]), jnp.float32)
    for ky in range(3):
        for kx in range(3):
            off = ky * wp + kx                       # constant row shift per tap
            a = x_ref[0, off:off + m, :]
            acc = acc + jnp.dot(a, w_ref[ky, kx], preferred_element_type=jnp.float32)
    r = acc + b_ref[...]
    if relu:
        r = jnp.maximum(r, 0.0)
    o_ref[0] = r.astype(o_ref.dtype)


def _conv3x3(x, wconv, bvec, relu, out_dtype):
    """3x3 stride-1 pad-1 conv on an NHWC image, bias (+ optional ReLU) fused.

    The image is zero-padded ((1,2),(1,2)) and flattened to rows so every (ky,kx) tap is
    a constant row offset -> 9 shifted bf16 matmuls with an f32 accumulator, no 9x
    im2col tensor in HBM.  Columns W..W+2 of the raw output mix adjacent image rows and
    are cropped in XLA (the crop fuses with the next layer's padding).
    """
    NB, H, W, Cin = x.shape
    Cout = wconv.shape[0]
    cin_p = _round_up(Cin, 8)
    hp, wp = H + 3, W + 3
    xpad = jnp.pad(x.astype(jnp.bfloat16),
                   ((0, 0), (1, 2), (1, 2), (0, cin_p - Cin)))
    xflat = xpad.reshape(NB, hp * wp, cin_p)
    wmat = jnp.transpose(wconv.astype(jnp.float32), (2, 3, 1, 0))       # (ky,kx,cin,cout)
    if cin_p > Cin:
        wmat = jnp.pad(wmat, ((0, 0), (0, 0), (0, cin_p - Cin), (0, 0)))
    wmat = wmat.astype(jnp.bfloat16)
    bias = bvec.reshape(1, Cout).astype(jnp.float32)
    tn = min(256, Cout)
    m = H * wp
    out_ext = pl.pallas_call(
        functools.partial(_conv3x3_kernel, wp=wp, relu=relu),
        out_shape=jax.ShapeDtypeStruct((NB, m, Cout), out_dtype),
        grid=(NB, Cout // tn),
        in_specs=[pl.BlockSpec((1, hp * wp, cin_p), lambda b, j: (b, 0, 0)),
                  pl.BlockSpec((3, 3, cin_p, tn), lambda b, j: (0, 0, 0, j)),
                  pl.BlockSpec((1, tn), lambda b, j: (0, j))],
        out_specs=pl.BlockSpec((1, m, tn), lambda b, j: (b, 0, j)),
        compiler_params=pltpu.CompilerParams(
            dimension_semantics=("parallel", "parallel"),
            vmem_limit_bytes=_CONV_VMEM),
    )(xflat, wmat, bias)
    return out_ext.reshape(NB, H, wp, Cout)[:, :, :W, :]
# TODO(synk): each grid step holds one whole padded image in VMEM; very large spatial
#             inputs would need an H-tile grid with halo handling (manual DMA).


# ----------------------------------------------------------------------------
# Pallas kernel 5: fused EdgeLoss (laplacian pyramid level + squared-diff reduction)
# ----------------------------------------------------------------------------
def _edge_kernel(xp_ref, yp_ref, o_ref, *, H, W):
    i = pl.program_id(0)

    @pl.when(i == 0)
    def _():
        o_ref[...] = jnp.zeros_like(o_ref)

    def gauss5(img):                                  # valid separable 5x5 -> (bt, H, W)
        t = _G1[0] * img[:, :, 0:W]
        for k in range(1, 5):
            t = t + _G1[k] * img[:, :, k:k + W]
        out = _G1[0] * t[:, 0:H, :]
        for k in range(1, 5):
            out = out + _G1[k] * t[:, k:k + H, :]
        return out

    def lap(xp):                                      # xp: (bt, H+4, W+4) replicate-padded
        f = gauss5(xp)
        ri = lax.broadcasted_iota(jnp.int32, f.shape, 1)
        ci = lax.broadcasted_iota(jnp.int32, f.shape, 2)
        nf = jnp.where(((ri % 2) == 0) & ((ci % 2) == 0), f * 4.0, 0.0)
        top = nf[:, 0:1, :]
        bot = nf[:, H - 1:H, :]
        nfp = jnp.concatenate([top, top, nf, bot, bot], axis=1)          # replicate pad H
        left = nfp[:, :, 0:1]
        right = nfp[:, :, W - 1:W]
        nfp = jnp.concatenate([left, left, nfp, right, right], axis=2)   # replicate pad W
        f2 = gauss5(nfp)
        return xp[:, 2:2 + H, 2:2 + W] - f2

    d = lap(xp_ref[...]) - lap(yp_ref[...])
    o_ref[...] += jnp.broadcast_to(jnp.sum(d * d), (1, _LANE))


def _edge_loss(x, y, weight=50.0):
    """EdgeLoss: mse(laplacian(x), laplacian(y)) * weight, laplacians never hit HBM."""
    Nb, C, H, W = x.shape
    B = Nb * C
    xp = jnp.pad(x.astype(jnp.float32), ((0, 0), (0, 0), (2, 2), (2, 2)),
                 mode="edge").reshape(B, H + 4, W + 4)
    yp = jnp.pad(y.astype(jnp.float32), ((0, 0), (0, 0), (2, 2), (2, 2)),
                 mode="edge").reshape(B, H + 4, W + 4)
    per_img = (H + 4) * (W + 4) * 4
    bt = 1
    for cand in range(1, B + 1):                     # largest divisor of B within budget
        if B % cand == 0 and cand * per_img <= 2 * 1024 * 1024:
            bt = cand
    out = pl.pallas_call(
        functools.partial(_edge_kernel, H=H, W=W),
        out_shape=jax.ShapeDtypeStruct((1, _LANE), jnp.float32),
        grid=(B // bt,),
        in_specs=[pl.BlockSpec((bt, H + 4, W + 4), lambda i: (i, 0, 0)),
                  pl.BlockSpec((bt, H + 4, W + 4), lambda i: (i, 0, 0))],
        out_specs=pl.BlockSpec((1, _LANE), lambda i: (0, 0)),
        compiler_params=pltpu.CompilerParams(
            dimension_semantics=("arbitrary",),
            vmem_limit_bytes=_REDUCE_VMEM),
    )(xp, yp)
    return (out[0, 0] / (B * H * W)) * weight


# ----------------------------------------------------------------------------
# Synthetic VGG19 feature extractor (conv1_2, conv2_2, conv3_4, conv4_4) -- NHWC
# ----------------------------------------------------------------------------
_VGG_CFG = [
    (3, 64, "conv1_1"), (64, 64, "conv1_2"), "pool",
    (64, 128, "conv2_1"), (128, 128, "conv2_2"), "pool",
    (128, 256, "conv3_1"), (256, 256, "conv3_2"),
    (256, 256, "conv3_3"), (256, 256, "conv3_4"), "pool",
    (256, 512, "conv4_1"), (512, 512, "conv4_2"),
    (512, 512, "conv4_3"), (512, 512, "conv4_4"),
]
_FEATURE_LAYERS = ("conv1_2", "conv2_2", "conv3_4", "conv4_4")
_LAYER_WEIGHTS = {k: 1.0 for k in _FEATURE_LAYERS}


def init_vgg_params(key):
    # Deterministic synthetic weights (He-normal); NOT a pretrained checkpoint.
    params = {}
    for item in _VGG_CFG:
        if item == "pool":
            continue
        cin, cout, name = item
        key, k1, k2 = jax.random.split(key, 3)
        w = jax.random.normal(k1, (cout, cin, 3, 3), jnp.float32) * (2.0 / (9 * cin)) ** 0.5
        bvec = jax.random.normal(k2, (cout,), jnp.float32) * 0.01
        params[name] = (w, bvec)
    return params


def _maxpool2_nhwc(x):
    NB, H, W, C = x.shape
    return x.reshape(NB, H // 2, 2, W // 2, 2, C).max(axis=(2, 4))


def _vgg_features(x_nchw, params):
    mean = jnp.array([0.485, 0.456, 0.406], jnp.float32).reshape(1, 1, 1, 3)
    std = jnp.array([0.229, 0.224, 0.225], jnp.float32).reshape(1, 1, 1, 3)
    h = jnp.transpose(x_nchw.astype(jnp.float32), (0, 2, 3, 1))   # NCHW -> NHWC, once
    h = (h + 1.0) / 2.0               # range_norm=True
    h = (h - mean) / std              # use_input_norm=True
    last_name = _VGG_CFG[-1][2]
    feats = {}
    for item in _VGG_CFG:
        if item == "pool":
            h = _maxpool2_nhwc(h)
            continue
        cin, cout, name = item
        w, bvec = params[name]
        if name in _FEATURE_LAYERS:
            pre = _conv3x3(h, w, bvec, relu=False, out_dtype=jnp.float32)  # pre-ReLU feature
            feats[name] = pre
            if name != last_name:
                h = jax.nn.relu(pre)
        else:
            h = _conv3x3(h, w, bvec, relu=True, out_dtype=jnp.bfloat16)    # fused ReLU, bf16
    return feats


def _perceptual_loss(pred, target, vgg_params, perceptual_weight=1.0):
    Nb = pred.shape[0]
    both = jnp.concatenate([pred, target], axis=0)        # one batched VGG pass
    feats = _vgg_features(both, vgg_params)
    pairs = [(feats[k][:Nb], feats[k][Nb:]) for k in _FEATURE_LAYERS]
    sums, ns = _multi_pair_sums(pairs)                    # one launch for all 4 feature MSEs
    total = jnp.float32(0.0)
    for idx, k in enumerate(_FEATURE_LAYERS):
        total = total + (sums[idx, 0] / ns[idx]) * _LAYER_WEIGHTS[k]
    return total * perceptual_weight


# ----------------------------------------------------------------------------
# CombinedLoss forward
# ----------------------------------------------------------------------------
def combined_loss(L1, R1, pred, target, R2, L2, L3, L4, vgg_params,
                  r_loss_weight=1.0, c_loss_weight=1.0, brightness_loss_weight=1.0,
                  l1_loss_weight=1.0, p_weight=1.0, edge_loss_weight=50.0):
    del L3, L4, brightness_loss_weight  # unused by the reference forward
    max_rgb = jnp.max(target, axis=1, keepdims=True)
    L1R1 = L1 * R1
    L2R2 = L2 * R2
    t_over_L2 = target / L2

    # --- all plain MSE / L1 reductions in ONE Pallas launch -------------------
    pairs = [(L1R1, target),       # 0: RLoss  loss1
             (L1, max_rgb),        # 1: RLoss  loss2 (mse part)
             (L2R2, target),       # 2: DLoss  loss1a
             (R2, t_over_L2),      # 3: DLoss  loss1b
             (L2, max_rgb),        # 4: DLoss  loss2
             (R2, R1),             # 5: CLoss
             (pred, target)]       # 6: L1Loss (uses the |.| channel)
    sums, ns = _multi_pair_sums(pairs)
    mse = lambda i: sums[i, 0] / ns[i]
    l1m = lambda i: sums[i, 1] / ns[i]

    tv = _tv_loss(L1)

    # --- contrast-preservation stds: one launch, target deduplicated ----------
    c_std = _contrast_stds([L1R1, target, L2R2, R2, t_over_L2])     # (5, C)
    contrast_r = jnp.sum(jnp.abs(c_std[1] - c_std[0]))              # (L1*R1, target)
    contrast_d = (jnp.sum(jnp.abs(c_std[1] - c_std[2]))             # (L2*R2, target)
                  + jnp.sum(jnp.abs(c_std[4] - c_std[3])))          # (R2, target/L2)

    r_loss_val = r_loss_weight * (mse(0) + (mse(1) + tv) + 0.5 * contrast_r)
    r_loss_val1 = r_loss_weight * ((mse(2) + mse(3)) + mse(4) + 0.5 * contrast_d)
    c_loss_val = mse(5)
    l1_loss_val = l1_loss_weight * l1m(6)
    edge_loss_val = _edge_loss(R1, R2, weight=edge_loss_weight)
    # brightness term: computed but never added in the torch reference -> skipped
    p_loss_val = _perceptual_loss(pred, target, vgg_params, perceptual_weight=p_weight)

    # Note: weights applied both inside the sub-losses and here, exactly as the torch code.
    total = (r_loss_weight * r_loss_val
             + r_loss_weight * 0.5 * r_loss_val1
             + c_loss_weight * c_loss_val
             + edge_loss_weight * edge_loss_val
             + p_weight * p_loss_val
             + l1_loss_weight * l1_loss_val)
    return total


if __name__ == "__main__":
    key = jax.random.PRNGKey(0)
    (kL1, kR1, kPred, kTgt, kR2, kL2, kL3, kL4, kVgg,
     kA, kB, kCx, kCw, kCb) = jax.random.split(key, 14)

    N, C, H, W = 2, 3, 16, 16
    # Illumination maps (positive, used as denominators), 1 channel.
    L1 = jax.random.uniform(kL1, (N, 1, H, W), jnp.float32, 0.2, 1.0)
    L2 = jax.random.uniform(kL2, (N, 1, H, W), jnp.float32, 0.2, 1.0)
    L3 = jax.random.uniform(kL3, (N, 1, H, W), jnp.float32, 0.2, 1.0)
    L4 = jax.random.uniform(kL4, (N, 1, H, W), jnp.float32, 0.2, 1.0)
    # Reflectance / images, 3 channels.
    R1 = jax.random.uniform(kR1, (N, C, H, W), jnp.float32, 0.0, 1.0)
    R2 = jax.random.uniform(kR2, (N, C, H, W), jnp.float32, 0.0, 1.0)
    pred = jax.random.uniform(kPred, (N, C, H, W), jnp.float32, 0.0, 1.0)
    target = jax.random.uniform(kTgt, (N, C, H, W), jnp.float32, 0.0, 1.0)

    vgg_params = init_vgg_params(kVgg)

    # --- sanity checks of the Pallas building blocks vs plain JAX ---
    _a = jax.random.uniform(kA, (5, 7, 11), jnp.float32)
    _b = jax.random.uniform(kB, (5, 7, 11), jnp.float32)
    sums, ns = _multi_pair_sums([(_a, _b), (_a[:2], _b[:2])])
    assert abs(float(sums[0, 0] / ns[0]) - float(jnp.mean((_a - _b) ** 2))) < 1e-5
    assert abs(float(sums[0, 1] / ns[0]) - float(jnp.mean(jnp.abs(_a - _b)))) < 1e-5
    assert abs(float(sums[1, 0] / ns[1]) - float(jnp.mean((_a[:2] - _b[:2]) ** 2))) < 1e-5

    def _dx_ref(x):
        p = jnp.pad(x.astype(jnp.float32), ((0, 0), (0, 0), (1, 1), (1, 1)))
        return p[:, :, :, :-1] - p[:, :, :, 1:]

    def _contrast_ref(orig, gen):
        tot = jnp.float32(0.0)
        for i in range(orig.shape[1]):
            odx = _dx_ref(orig[:, i:i + 1])
            gdx = _dx_ref(gen[:, i:i + 1])
            tot = tot + jnp.abs(jnp.std(gdx, ddof=1) - jnp.std(odx, ddof=1))
        return tot

    c_std = _contrast_stds([R1, target])
    c_got = jnp.sum(jnp.abs(c_std[1] - c_std[0]))
    assert abs(float(c_got) - float(_contrast_ref(R1, target))) < 1e-3

    tv_got = _tv_loss(L1)
    tv_ref = (jnp.mean(jnp.abs(L1[:, :, :, :-1] - L1[:, :, :, 1:]))
              + jnp.mean(jnp.abs(L1[:, :, :-1, :] - L1[:, :, 1:, :])))
    assert abs(float(tv_got) - float(tv_ref)) < 1e-5

    def _lap_ref(x):
        g1 = jnp.array(_G1, jnp.float32)
        kk = jnp.outer(g1, g1)

        def cg(img):
            _, _, hh, ww = img.shape
            p = jnp.pad(img, ((0, 0), (0, 0), (2, 2), (2, 2)), mode="edge")
            acc = jnp.zeros_like(img)
            for dy in range(5):
                for dxx in range(5):
                    acc = acc + kk[dy, dxx] * p[:, :, dy:dy + hh, dxx:dxx + ww]
            return acc

        f = cg(x)
        nf = jnp.zeros_like(f).at[:, :, ::2, ::2].set(f[:, :, ::2, ::2] * 4.0)
        return x - cg(nf)

    edge_got = _edge_loss(R1, R2, weight=50.0)
    edge_ref = jnp.mean((_lap_ref(R1) - _lap_ref(R2)) ** 2) * 50.0
    assert abs(float(edge_got) - float(edge_ref)) < 1e-3

    xt = jax.random.uniform(kCx, (2, 8, 8, 16), jnp.float32, -1.0, 1.0)
    wt = jax.random.normal(kCw, (64, 16, 3, 3), jnp.float32) * 0.05
    bt_ = jax.random.normal(kCb, (64,), jnp.float32) * 0.1
    conv_got = _conv3x3(xt, wt, bt_, relu=False, out_dtype=jnp.float32)
    conv_ref = lax.conv_general_dilated(
        xt, wt, (1, 1), "SAME",
        dimension_numbers=("NHWC", "OIHW", "NHWC")) + bt_.reshape(1, 1, 1, -1)
    assert float(jnp.max(jnp.abs(conv_got - conv_ref))) < 0.05  # bf16 matmul tolerance

    # --- full forward ---
    total = jax.jit(combined_loss)(L1, R1, pred, target, R2, L2, L3, L4, vgg_params)
    total = jax.block_until_ready(total)
    assert total.shape == () and bool(jnp.isfinite(total))
    print("KERNEL_OK")
</pallas_src>

<mosaic_0001>
module attributes {stable_mosaic.version = 11 : i64} {
  func.func @_multi_pair_kernel(%arg0: i32, %arg1: i32, %arg2: memref<2xi32, #tpu.memory_space<smem>>, %arg3: memref<1x8x128xf32, #tpu.memory_space<vmem>>, %arg4: memref<1x8x128xf32, #tpu.memory_space<vmem>>, %arg5: memref<1x2x128xf32, #tpu.memory_space<vmem>>) attributes {dimension_semantics = [#tpu.dimension_semantics<parallel>, #tpu.dimension_semantics<arbitrary>], iteration_bounds = array<i64: 2, 1>, scalar_prefetch = 1 : i64, scratch_operands = 0 : i64, tpu.core_type = #tpu.core_type<tc>, window_params = [{transform_indices = @transform_0, window_bounds = array<i64: 1, 8, 128>}, {transform_indices = @transform_1, window_bounds = array<i64: 1, 8, 128>}, {transform_indices = @transform_2, window_bounds = array<i64: 1, 2, 128>}]} {
    %c0_i32 = arith.constant 0 : i32
    %0 = arith.cmpi eq, %arg1, %c0_i32 : i32
    %1 = arith.extui %0 : i1 to i32
    %c0_i32_0 = arith.constant 0 : i32
    %2 = arith.cmpi ne, %1, %c0_i32_0 : i32
    scf.if %2 {
      %cst = arith.constant 0.000000e+00 : f32
      %21 = vector.broadcast %cst : f32 to vector<1x2x128xf32>
      %c0_10 = arith.constant 0 : index
      %c0_11 = arith.constant 0 : index
      %c0_12 = arith.constant 0 : index
      %22 = vector.load %arg5[%c0_10, %c0_11, %c0_12] : memref<1x2x128xf32, #tpu.memory_space<vmem>>, vector<1x2x128xf32>
      tpu.vector_store %arg5[%c0_10, %c0_11, %c0_12], %21 {strides = array<i32>} : memref<1x2x128xf32, #tpu.memory_space<vmem>>, vector<1x2x128xf32>,
    } else {
    }
    %3 = arith.index_cast %arg0 : i32 to index
    %4 = memref.load %arg2[%3] : memref<2xi32, #tpu.memory_space<smem>>
    %c1024_i32 = arith.constant 1024 : i32
    %5 = arith.muli %arg1, %c1024_i32 : i32
    %c0 = arith.constant 0 : index
    %c0_1 = arith.constant 0 : index
    %c0_2 = arith.constant 0 : index
    %6 = vector.load %arg3[%c0, %c0_1, %c0_2] : memref<1x8x128xf32, #tpu.memory_space<vmem>>, vector<1x8x128xf32>
    %c0_3 = arith.constant 0 : index
    %c0_4 = arith.constant 0 : index
    %c0_5 = arith.constant 0 : index
    %7 = vector.load %arg4[%c0_3, %c0_4, %c0_5] : memref<1x8x128xf32, #tpu.memory_space<vmem>>, vector<1x8x128xf32>
    %8 = arith.subf %6, %7 : vector<1x8x128xf32>
    %9 = arith.mulf %8, %8 : vector<1x8x128xf32>
    %10 = math.absf %8 : vector<1x8x128xf32>
    %c1024_i32_6 = arith.constant 1024 : i32
    %11 = arith.addi %5, %c1024_i32_6 : i32
    %12 = arith.cmpi sle, %11, %4 : i32
    %13 = arith.extui %12 : i1 to i32
    %c0_i32_7 = arith.constant 0 : i32
    %14 = arith.cmpi ne, %13, %c0_i32_7 : i32
    scf.if %14 {
      %c0_10 = arith.constant 0 : index
      %c0_11 = arith.constant 0 : index
      %c0_12 = arith.constant 0 : index
      %21 = vector.load %arg5[%c0_10, %c0_11, %c0_12] : memref<1x2x128xf32, #tpu.memory_space<vmem>>, vector<1x1x128xf32>
      %cst = arith.constant dense<0.000000e+00> : vector<1x128xf32>
      %22 = vector.multi_reduction <add>, %9, %cst [1] : vector<1x8x128xf32> to vector<1x128xf32>
      %23 = vector.shape_cast %22 : vector<1x128xf32> to vector<1x1x128xf32>
      %24 = arith.addf %21, %23 : vector<1x1x128xf32>
      %c0_13 = arith.constant 0 : index
      %c0_14 = arith.constant 0 : index
      %c0_15 = arith.constant 0 : index
      %25 = vector.load %arg5[%c0_13, %c0_14, %c0_15] : memref<1x2x128xf32, #tpu.memory_space<vmem>>, vector<1x1x128xf32>
      tpu.vector_store %arg5[%c0_13, %c0_14, %c0_15], %24 {strides = array<i32>} : memref<1x2x128xf32, #tpu.memory_space<vmem>>, vector<1x1x128xf32>,
      %c0_16 = arith.constant 0 : index
      %c1 = arith.constant 1 : index
      %c0_17 = arith.constant 0 : index
      %26 = vector.load %arg5[%c0_16, %c1, %c0_17] : memref<1x2x128xf32, #tpu.memory_space<vmem>>, vector<1x1x128xf32>
      %cst_18 = arith.constant dense<0.000000e+00> : vector<1x128xf32>
      %27 = vector.multi_reduction <add>, %10, %cst_18 [1] : vector<1x8x128xf32> to vector<1x128xf32>
      %28 = vector.shape_cast %27 : vector<1x128xf32> to vector<1x1x128xf32>
      %29 = arith.addf %26, %28 : vector<1x1x128xf32>
      %c0_19 = arith.constant 0 : index
      %c1_20 = arith.constant 1 : index
      %c0_21 = arith.constant 0 : index
      %30 = vector.load %arg5[%c0_19, %c1_20, %c0_21] : memref<1x2x128xf32, #tpu.memory_space<vmem>>, vector<1x1x128xf32>
      tpu.vector_store %arg5[%c0_19, %c1_20, %c0_21], %29 {strides = array<i32>} : memref<1x2x128xf32, #tpu.memory_space<vmem>>, vector<1x1x128xf32>,
    } else {
    }
    %15 = arith.cmpi slt, %5, %4 : i32
    %c1024_i32_8 = arith.constant 1024 : i32
    %16 = arith.addi %5, %c1024_i32_8 : i32
    %17 = arith.cmpi sgt, %16, %4 : i32
    %18 = arith.andi %15, %17 : i1
    %19 = arith.extui %18 : i1 to i32
    %c0_i32_9 = arith.constant 0 : i32
    %20 = arith.cmpi ne, %19, %c0_i32_9 : i32
    scf.if %20 {
      %21 = tpu.iota {dimensions = array<i32: 1>} : vector<1x8x128xi32>
      %22 = tpu.iota {dimensions = array<i32: 2>} : vector<1x8x128xi32>
      %c128_i32 = arith.constant 128 : i32
      %23 = vector.broadcast %c128_i32 : i32 to vector<1x8x128xi32>
      %24 = arith.muli %21, %23 : vector<1x8x128xi32>
      %25 = vector.broadcast %5 : i32 to vector<1x8x128xi32>
      %26 = arith.addi %25, %24 : vector<1x8x128xi32>
      %27 = arith.addi %26, %22 : vector<1x8x128xi32>
      %28 = vector.broadcast %4 : i32 to vector<1x8x128xi32>
      %29 = arith.cmpi slt, %27, %28 : vector<1x8x128xi32>
      %c0_10 = arith.constant 0 : index
      %c0_11 = arith.constant 0 : index
      %c0_12 = arith.constant 0 : index
      %30 = vector.load %arg5[%c0_10, %c0_11, %c0_12] : memref<1x2x128xf32, #tpu.memory_space<vmem>>, vector<1x1x128xf32>
      %cst = arith.constant 0.000000e+00 : f32
      %31 = vector.broadcast %cst : f32 to vector<1x8x128xf32>
      %32 = arith.select %29, %9, %31 : vector<1x8x128xi1>, vector<1x8x128xf32>
      %cst_13 = arith.constant dense<0.000000e+00> : vector<1x128xf32>
      %33 = vector.multi_reduction <add>, %32, %cst_13 [1] : vector<1x8x128xf32> to vector<1x128xf32>
      %34 = vector.shape_cast %33 : vector<1x128xf32> to vector<1x1x128xf32>
      %35 = arith.addf %30, %34 : vector<1x1x128xf32>
      %c0_14 = arith.constant 0 : index
      %c0_15 = arith.constant 0 : index
      %c0_16 = arith.constant 0 : index
      %36 = vector.load %arg5[%c0_14, %c0_15, %c0_16] : memref<1x2x128xf32, #tpu.memory_space<vmem>>, vector<1x1x128xf32>
      tpu.vector_store %arg5[%c0_14, %c0_15, %c0_16], %35 {strides = array<i32>} : memref<1x2x128xf32, #tpu.memory_space<vmem>>, vector<1x1x128xf32>,
      %c0_17 = arith.constant 0 : index
      %c1 = arith.constant 1 : index
      %c0_18 = arith.constant 0 : index
      %37 = vector.load %arg5[%c0_17, %c1, %c0_18] : memref<1x2x128xf32, #tpu.memory_space<vmem>>, vector<1x1x128xf32>
      %cst_19 = arith.constant 0.000000e+00 : f32
      %38 = vector.broadcast %cst_19 : f32 to vector<1x8x128xf32>
      %39 = arith.select %29, %10, %38 : vector<1x8x128xi1>, vector<1x8x128xf32>
      %cst_20 = arith.constant dense<0.000000e+00> : vector<1x128xf32>
      %40 = vector.multi_reduction <add>, %39, %cst_20 [1] : vector<1x8x128xf32> to vector<1x128xf32>
      %41 = vector.shape_cast %40 : vector<1x128xf32> to vector<1x1x128xf32>
      %42 = arith.addf %37, %41 : vector<1x1x128xf32>
      %c0_21 = arith.constant 0 : index
      %c1_22 = arith.constant 1 : index
      %c0_23 = arith.constant 0 : index
      %43 = vector.load %arg5[%c0_21, %c1_22, %c0_23] : memref<1x2x128xf32, #tpu.memory_space<vmem>>, vector<1x1x128xf32>
      tpu.vector_store %arg5[%c0_21, %c1_22, %c0_23], %42 {strides = array<i32>} : memref<1x2x128xf32, #tpu.memory_space<vmem>>, vector<1x1x128xf32>,
    } else {
    }
    return
  }
  func.func @transform_0(%arg0: i32, %arg1: i32, %arg2: memref<2xi32, #tpu.memory_space<smem>>) -> (i32, i32, i32) {
    %c0_i32 = arith.constant 0 : i32
    %c0_i32_0 = arith.constant 0 : i32
    return %arg0, %arg1, %c0_i32 : i32, i32, i32
  }
  func.func @transform_1(%arg0: i32, %arg1: i32, %arg2: memref<2xi32, #tpu.memory_space<smem>>) -> (i32, i32, i32) {
    %c0_i32 = arith.constant 0 : i32
    %c0_i32_0 = arith.constant 0 : i32
    return %arg0, %arg1, %c0_i32 : i32, i32, i32
  }
  func.func @transform_2(%arg0: i32, %arg1: i32, %arg2: memref<2xi32, #tpu.memory_space<smem>>) -> (i32, i32, i32) {
    %c0_i32 = arith.constant 0 : i32
    %c0_i32_0 = arith.constant 0 : i32
    %c0_i32_1 = arith.constant 0 : i32
    return %arg0, %c0_i32, %c0_i32_0 : i32, i32, i32
  }
}

</mosaic_0001>

<llo_original>
// kernel: tpu_custom_call.1
$region0: #{tpu_custom_call.1}
  #allocation0 [shape = 'u32[]', space=smem, size = 0x4, offset = 0x4, fixed_abs, tag = 'smem constant byte address 0x4 - core index']
  #allocation1 [shape = 'u32[72,128]{1,0:T(1,128)}', space=vmem, size = 0x9000, scoped, tag = 'internal scratch']
  #allocation2 [shape = 's32[1]{0}', space=sflag, size = 0x4, scoped, tag = 'scoped memory for tpu_custom_call.1']
  #allocation3 [shape = 'u8[512]{0}', space=smem, size = 0x200, scoped, tag = 'prefetched SMEM operand 0']
  %s0 = inlined_call_operand.hbm [shape: s32[2], index: 0, kind: input, shape index: {}]
  %s1 = inlined_call_operand.hbm [shape: f32[2,8,128], index: 1, kind: input, shape index: {}]
  %s2 = inlined_call_operand.hbm [shape: f32[2,8,128], index: 2, kind: input, shape index: {}]
  %s3 = inlined_call_operand.hbm [shape: f32[2,2,128], index: 3, kind: output, shape index: {}]
  %s4 = sld [smem:[#allocation0]]
  $region61: #{tpu_custom_call.1} parent=0
    _
  %s6 = ssub.s32 1, %s4
  %s7 = scalar_select 0, %s6, %s4
  %s9 = sshll.u32 %s0, 4
  %s10 = int_to_ptr.hbm [resolvable:$true] %s9
  %12 = dma.hbm_to_smem %s10, 16, [#allocation3], [#allocation2]
  %14 = dma.done [#allocation2], 16
  %15 = sfence
  $region1: #{tpu_custom_call.1} parent=0
    #allocation4 [shape = 'u8[8192]{0}', space=vmem, size = 0x2000, scoped, tag = 'input window, operand 1']
    #allocation5 [shape = 's32[2]{0}', space=sflag, size = 0x8, scoped, tag = 'scoped memory for tpu_custom_call.1']
    #allocation6 [shape = 's32[2]{0}', space=sflag, size = 0x8, scoped, tag = 'scoped memory for tpu_custom_call.1']
    #allocation7 [shape = 'u8[8192]{0}', space=vmem, size = 0x2000, scoped, tag = 'input window, operand 2']
    #allocation8 [shape = 's32[2]{0}', space=sflag, size = 0x8, scoped, tag = 'scoped memory for tpu_custom_call.1']
    #allocation9 [shape = 'u8[2048]{0}', space=vmem, size = 0x800, scoped, tag = 'output window, operand 0']
    %16 = vsyncpa [#allocation5], 0
    %s17 = scalar_lea.sflag [#allocation5], 1
    %18 = vsyncpa %s17, 0
    %19 = vsyncpa [#allocation8], 0
    %s20 = scalar_lea.sflag [#allocation8], 1
    %21 = vsyncpa %s20, 0
    %22 = vsyncpa [#allocation6], 0
    %s23 = scalar_lea.sflag [#allocation6], 1
    %24 = vsyncpa %s23, 0
    loop: start=0, step=1, limit=4
    $region2: #{tpu_custom_call.1} parent=1 // loop_pre_header
      _
    $region3: #{tpu_custom_call.1} parent=1 // loop_header
      %s26 = sphi 0, %s30
      %p27 = scmp.ge.s32.totalorder %s26, 4
      %s33 = sphi 0, %s45
      %s34 = sphi 0, %s41
      %s35 = sphi 0, %s33
      %s36 = sphi 0, %s34
      %s37 = sphi 0, %s35
      %s38 = sphi 0, %s36
      %s50 = sphi 0, %s52
      %s53 = sphi 0, %s50
      %s54 = sphi 0, %s53
      %s70 = sphi 0, %s54
      %s78 = sphi 0, %s80
      %s81 = sphi 0, %s78
      %s82 = sphi 0, %s81
      %s98 = sphi 0, %s82
      %s104 = sphi 0, %s106
      %s107 = sphi 0, %s104
      %s108 = sphi 0, %s107
      %s124 = sphi 0, %s108
    $region4: #{tpu_custom_call.1} parent=1 // loop_header_branch
      %29 = sbr.rel (%p27) target = $region8
    $region5: #{tpu_custom_call.1} parent=1 // loop_body
      %s31 = ssub.s32 %s26, 1
      %s32 = ssub.s32 %s26, 2
      %s39 = sadd.s32 1, %s34
      %p40 = scmp.ge.s32.totalorder %s39, 1
      %s41 = scalar_select %p40, 0, %s39
      %s42 = sadd.s32 1, %s33
      %s43 = scalar_select %p40, %s42, %s33
      %p44 = scmp.ge.s32.totalorder %s43, 2
      %s45 = scalar_select %p44, 0, %s43
      %s46 = ssub.s32 %s33, %s45
      %s47 = ssub.s32 %s34, %s41
      %s48 = sor.u32 %s46, %s47
      %p49 = scmp.eq.s32.totalorder %s48, 0
      %s51 = sadd.s32 %s50, 1
      %s52 = scalar_select %p49, %s50, %s51
      %p55 = pneg %p49
      %p56 = scmp.eq.s32.totalorder %s26, 1
      %p57 = por %p55, %p56
      %p58 = scmp.ne.s32.totalorder %s50, %s53
      %p59 = scmp.eq.s32.totalorder %s26, 0
      %p60 = por %p58, %p59
      %p61 = scmp.ne.s32.totalorder %s50, %s53
      %p62 = scmp.eq.s32.totalorder %s31, 1
      %p63 = por %p61, %p62
      %p64 = scmp.ne.s32.totalorder %s53, %s54
      %p65 = scmp.eq.s32.totalorder %s31, 0
      %p66 = por %p64, %p65
      %p67 = scmp.ne.s32.totalorder %s53, %s54
      %p68 = scmp.eq.s32.totalorder %s32, 1
      %p69 = por %p67, %p68
      %p71 = scmp.ne.s32.totalorder %s54, %s70
      %p72 = scmp.eq.s32.totalorder %s32, 0
      %p73 = por %p71, %p72
      %s74 = ssub.s32 %s33, %s45
      %s75 = ssub.s32 %s34, %s41
      %s76 = sor.u32 %s74, %s75
      %p77 = scmp.eq.s32.totalorder %s76, 0
      %s79 = sadd.s32 %s78, 1
      %s80 = scalar_select %p77, %s78, %s79
      %p83 = pneg %p77
      %p84 = scmp.eq.s32.totalorder %s26, 1
      %p85 = por %p83, %p84
      %p86 = scmp.ne.s32.totalorder %s78, %s81
      %p87 = scmp.eq.s32.totalorder %s26, 0
      %p88 = por %p86, %p87
      %p89 = scmp.ne.s32.totalorder %s78, %s81
      %p90 = scmp.eq.s32.totalorder %s31, 1
      %p91 = por %p89, %p90
      %p92 = scmp.ne.s32.totalorder %s81, %s82
      %p93 = scmp.eq.s32.totalorder %s31, 0
      %p94 = por %p92, %p93
      %p95 = scmp.ne.s32.totalorder %s81, %s82
      %p96 = scmp.eq.s32.totalorder %s32, 1
      %p97 = por %p95, %p96
      %p99 = scmp.ne.s32.totalorder %s82, %s98
      %p100 = scmp.eq.s32.totalorder %s32, 0
      %p101 = por %p99, %p100
      %s102 = ssub.s32 %s33, %s45
      %p103 = scmp.eq.s32.totalorder %s102, 0
      %s105 = sadd.s32 %s104, 1
      %s106 = scalar_select %p103, %s104, %s105
      %p109 = pneg %p103
      %p110 = scmp.eq.s32.totalorder %s26, 1
      %p111 = por %p109, %p110
      %p112 = scmp.ne.s32.totalorder %s104, %s107
      %p113 = scmp.eq.s32.totalorder %s26, 0
      %p114 = por %p112, %p113
      %p115 = scmp.ne.s32.totalorder %s104, %s107
      %p116 = scmp.eq.s32.totalorder %s31, 1
      %p117 = por %p115, %p116
      %p118 = scmp.ne.s32.totalorder %s107, %s108
      %p119 = scmp.eq.s32.totalorder %s31, 0
      %p120 = por %p118, %p119
      %p121 = scmp.ne.s32.totalorder %s107, %s108
      %p122 = scmp.eq.s32.totalorder %s32, 1
      %p123 = por %p121, %p122
      %p125 = scmp.ne.s32.totalorder %s108, %s124
      %p126 = scmp.eq.s32.totalorder %s32, 0
      %p127 = por %p125, %p126
      %p128 = scmp.le.s32.totalorder 1, %s26
      %p129 = scmp.lt.s32.totalorder %s26, 3
      %p130 = pnand %p128, %p129
      %p131 = pneg %p130
      // Predicated region
      $region9: #{tpu_custom_call.1} parent=5 // pred_check
        _
      $region10: #{tpu_custom_call.1} parent=5 // pred_check_branch
        %133 = sbr.rel (%p130) target = $region12
      $region11: #{tpu_custom_call.1} parent=5 // pred_region
        %s134 = ssub.s32 %s26, 1
      $region12: #{tpu_custom_call.1} parent=5 // pred_fallthru
        _
      %p135 = scmp.lt.s32.totalorder %s26, 2
      // Predicated region
      $region13: #{tpu_custom_call.1} parent=5 // pred_check
        %p136 = pneg %p135
      $region14: #{tpu_custom_call.1} parent=5 // pred_check_branch
        %138 = sbr.rel (%p136) target = $region16
      $region15: #{tpu_custom_call.1} parent=5 // pred_region
        // Predicated region
        $region17: #{tpu_custom_call.1} parent=15 // pred_check
          %p139 = pneg %p60
        $region18: #{tpu_custom_call.1} parent=15 // pred_check_branch
          %141 = sbr.rel (%p139) target = $region20
        $region19: #{tpu_custom_call.1} parent=15 // pred_region
          %s142 = sand.u32 %s50, 1
          %s143 = scalar_lea.sflag [#allocation5], %s142
          %s144 = sand.u32 %s50, 1
          %s145 = smul.addr %s144, 8
          %s146 = scalar_lea.vmem [#allocation4], %s145
          %148 = vsyncadd %s143, 0
          %s149 = sadd.s32 %s34, %s33
          %s150 = smul.addr %s149, 8
          %s151 = scalar_lea.hbm %s1, %s150
          %s153 = sshll.u32 %s151, 4
          %s154 = int_to_ptr.hbm [resolvable:$true] %s153
          %s155 = sshll.u32 %s146, 4
          %s156 = int_to_ptr.vmem [resolvable:$true] %s155
          %158 = dma.hbm_to_vmem [thread:$0]  %s154, 128, %s156, %s143
        $region20: #{tpu_custom_call.1} parent=15 // pred_fallthru
          _
        // Predicated region
        $region21: #{tpu_custom_call.1} parent=15 // pred_check
          %p159 = pneg %p88
        $region22: #{tpu_custom_call.1} parent=15 // pred_check_branch
          %161 = sbr.rel (%p159) target = $region24
        $region23: #{tpu_custom_call.1} parent=15 // pred_region
          %s162 = sand.u32 %s78, 1
          %s163 = scalar_lea.sflag [#allocation8], %s162
          %s164 = sand.u32 %s78, 1
          %s165 = smul.addr %s164, 8
          %s166 = scalar_lea.vmem [#allocation7], %s165
          %168 = vsyncadd %s163, 0
          %s169 = sadd.s32 %s34, %s33
          %s170 = smul.addr %s169, 8
          %s171 = scalar_lea.hbm %s2, %s170
          %s173 = sshll.u32 %s171, 4
          %s174 = int_to_ptr.hbm [resolvable:$true] %s173
          %s175 = sshll.u32 %s166, 4
          %s176 = int_to_ptr.vmem [resolvable:$true] %s175
          %178 = dma.hbm_to_vmem [thread:$0]  %s174, 128, %s176, %s163
        $region24: #{tpu_custom_call.1} parent=15 // pred_fallthru
          _
      $region16: #{tpu_custom_call.1} parent=5 // pred_fallthru
        _
      %p179 = scmp.le.s32.totalorder 1, %s26
      %p180 = scmp.lt.s32.totalorder %s26, 3
      %p181 = pnand %p179, %p180
      %p182 = pneg %p181
      // Predicated region
      $region25: #{tpu_custom_call.1} parent=5 // pred_check
        _
      $region26: #{tpu_custom_call.1} parent=5 // pred_check_branch
        %184 = sbr.rel (%p181) target = $region28
      $region27: #{tpu_custom_call.1} parent=5 // pred_region
        %s185 = ssub.s32 %s26, 1
        %s186 = sand.u32 %s53, 1
        %s187 = scalar_lea.sflag [#allocation5], %s186
        %s188 = sand.u32 %s53, 1
        %s189 = smul.addr %s188, 8
        %s190 = scalar_lea.vmem [#allocation4], %s189
        // Predicated region
        $region29: #{tpu_custom_call.1} parent=27 // pred_check
          %p191 = pneg %p66
        $region30: #{tpu_custom_call.1} parent=27 // pred_check_branch
          %193 = sbr.rel (%p191) target = $region32
        $region31: #{tpu_custom_call.1} parent=27 // pred_region
          %195 = dma.done %s187, 128
        $region32: #{tpu_custom_call.1} parent=27 // pred_fallthru
          _
        %s196 = sand.u32 %s81, 1
        %s197 = scalar_lea.sflag [#allocation8], %s196
        %s198 = sand.u32 %s81, 1
        %s199 = smul.addr %s198, 8
        %s200 = scalar_lea.vmem [#allocation7], %s199
        // Predicated region
        $region33: #{tpu_custom_call.1} parent=27 // pred_check
          %p201 = pneg %p94
        $region34: #{tpu_custom_call.1} parent=27 // pred_check_branch
          %203 = sbr.rel (%p201) target = $region36
        $region35: #{tpu_custom_call.1} parent=27 // pred_region
          %205 = dma.done %s197, 128
        $region36: #{tpu_custom_call.1} parent=27 // pred_fallthru
          _
        %s206 = sand.u32 %s53, 1
        %s207 = scalar_lea.sflag [#allocation5], %s206
        %s208 = sand.u32 %s53, 1
        %s209 = smul.addr %s208, 8
        %s210 = scalar_lea.vmem [#allocation4], %s209
        %p211 = pneg %p66
        %p212 = pneg %p63
        %s213 = sand.u32 %s81, 1
        %s214 = scalar_lea.sflag [#allocation8], %s213
        %s215 = sand.u32 %s81, 1
        %s216 = smul.addr %s215, 8
        %s217 = scalar_lea.vmem [#allocation7], %s216
        %p218 = pneg %p94
        %p219 = pneg %p91
        %p220 = pneg %p120
        %p221 = pneg %p117
        %s222 = sand.u32 %s107, 1
        %s223 = scalar_lea.sflag [#allocation6], %s222
        %s224 = sand.u32 %s107, 1
        %s225 = smul.addr %s224, 2
        %s226 = scalar_lea.vmem [#allocation9], %s225
        %p227 = scmp.eq.s32.totalorder %s36, 0
        // Predicated region
        $region37: #{tpu_custom_call.1} parent=27 // pred_check
          %p228 = pneg %p227
        $region38: #{tpu_custom_call.1} parent=27 // pred_check_branch
          %230 = sbr.rel (%p228) target = $region40
        $region39: #{tpu_custom_call.1} parent=27 // pred_region
          %231 = vst [vmem:[%s226] sm:$0x3] 0.0
        $region40: #{tpu_custom_call.1} parent=27 // pred_fallthru
          _
        %s232 = sld [smem:[#allocation3 + %s35]]
        %s233 = smul.u32 %s36, 1024
        %v234 = vld [vmem:[%s190] sm:$0xff]
        %v235 = vld [vmem:[%s200] sm:$0xff]
        %v236 = vsub.f32 %v234, %v235
        %v237 = vmul.f32 %v236, %v236
        %v238 = vand.u32 2147483647, %v236
        %s239 = sadd.s32 %s233, 1024
        %p240 = scmp.le.s32.totalorder %s239, %s232
        // Predicated region
        $region41: #{tpu_custom_call.1} parent=27 // pred_check
          %p241 = pneg %p240
        $region42: #{tpu_custom_call.1} parent=27 // pred_check_branch
          %243 = sbr.rel (%p241) target = $region44
        $region43: #{tpu_custom_call.1} parent=27 // pred_region
          %v244 = vld [vmem:[%s226] sm:$0x1]
          %v245 = vrot.slane %v237, 4
          %v246 = vadd.f32 %v237, %v245
          %v247 = vrot.slane %v246, 2
          %v248 = vadd.f32 %v246, %v247
          %v249 = vrot.slane %v248, 1
          %v250 = vadd.f32 %v248, %v249
          %v251 = vadd.f32 %v244, %v250
          %252 = vst [vmem:[%s226] sm:$0x1] %v251
          %v253 = vld [vmem:[%s226 + $0x1] sm:$0x1]
          %v254 = vrot.slane %v238, 4
          %v255 = vadd.f32 %v238, %v254
          %v256 = vrot.slane %v255, 2
          %v257 = vadd.f32 %v255, %v256
          %v258 = vrot.slane %v257, 1
          %v259 = vadd.f32 %v257, %v258
          %v260 = vadd.f32 %v253, %v259
          %261 = vst [vmem:[%s226 + $0x1] sm:$0x1] %v260
        $region44: #{tpu_custom_call.1} parent=27 // pred_fallthru
          _
        %p262 = scmp.lt.s32.totalorder %s233, %s232
        %p263 = scmp.gt.s32.totalorder %s239, %s232
        %p264 = pnand %p262, %p263
        %p265 = pneg %p264
        // Predicated region
        $region45: #{tpu_custom_call.1} parent=27 // pred_check
          _
        $region46: #{tpu_custom_call.1} parent=27 // pred_check_branch
          %267 = sbr.rel (%p264) target = $region48
        $region47: #{tpu_custom_call.1} parent=27 // pred_region
          %v268 = vlaneseq
          %v269 = vshrl.u32 %v268, 7
          %v270 = vlaneseq
          %v271 = vand.u32 %v270, 127
          %v272 = vmul.u32 %v269, 128
          %v273 = vstv %s233
          %v274 = vadd.s32 %v273, %v272
          %v275 = vadd.s32 %v274, %v271
          %v276 = vstv %s232
          %vm277 = vcmp.lt.s32.totalorder %v275, %v276
          %v278 = vld [vmem:[%s226] sm:$0x1]
          %v279 = vsel %vm277, %v237, 0.0
          %v280 = vrot.slane %v279, 4
          %v281 = vadd.f32 %v279, %v280
          %v282 = vrot.slane %v281, 2
          %v283 = vadd.f32 %v281, %v282
          %v284 = vrot.slane %v283, 1
          %v285 = vadd.f32 %v283, %v284
          %v286 = vadd.f32 %v278, %v285
          %287 = vst [vmem:[%s226] sm:$0x1] %v286
          %v288 = vld [vmem:[%s226 + $0x1] sm:$0x1]
          %v289 = vsel %vm277, %v238, 0.0
          %v290 = vrot.slane %v289, 4
          %v291 = vadd.f32 %v289, %v290
          %v292 = vrot.slane %v291, 2
          %v293 = vadd.f32 %v291, %v292
          %v294 = vrot.slane %v293, 1
          %v295 = vadd.f32 %v293, %v294
          %v296 = vadd.f32 %v288, %v295
          %297 = vst [vmem:[%s226 + $0x1] sm:$0x1] %v296
        $region48: #{tpu_custom_call.1} parent=27 // pred_fallthru
          _
        %s298 = sand.u32 %s107, 1
        %s299 = scalar_lea.sflag [#allocation6], %s298
        %s300 = sand.u32 %s107, 1
        %s301 = smul.addr %s300, 2
        %s302 = scalar_lea.vmem [#allocation9], %s301
        // Predicated region
        $region49: #{tpu_custom_call.1} parent=27 // pred_check
          %p303 = pneg %p117
        $region50: #{tpu_custom_call.1} parent=27 // pred_check_branch
          %305 = sbr.rel (%p303) target = $region52
        $region51: #{tpu_custom_call.1} parent=27 // pred_region
          %307 = vsyncadd %s299, 0
          %s308 = smul.addr %s35, 2
          %s309 = scalar_lea.hbm %s3, %s308
          %s311 = sshll.u32 %s302, 4
          %s312 = int_to_ptr.vmem [resolvable:$true] %s311
          %s313 = sshll.u32 %s309, 4
          %s314 = int_to_ptr.hbm [resolvable:$true] %s313
          %316 = dma.vmem_to_hbm [thread:$0]  %s312, 32, %s314, %s299
        $region52: #{tpu_custom_call.1} parent=27 // pred_fallthru
          _
      $region28: #{tpu_custom_call.1} parent=5 // pred_fallthru
        _
      %p317 = scmp.le.s32.totalorder 2, %s26
      // Predicated region
      $region53: #{tpu_custom_call.1} parent=5 // pred_check
        %p318 = pneg %p317
      $region54: #{tpu_custom_call.1} parent=5 // pred_check_branch
        %320 = sbr.rel (%p318) target = $region56
      $region55: #{tpu_custom_call.1} parent=5 // pred_region
        %s321 = ssub.s32 %s26, 2
        // Predicated region
        $region57: #{tpu_custom_call.1} parent=55 // pred_check
          %p322 = pneg %p123
        $region58: #{tpu_custom_call.1} parent=55 // pred_check_branch
          %324 = sbr.rel (%p322) target = $region60
        $region59: #{tpu_custom_call.1} parent=55 // pred_region
          %s325 = sand.u32 %s108, 1
          %s326 = scalar_lea.sflag [#allocation6], %s325
          %s327 = sand.u32 %s108, 1
          %s328 = smul.addr %s327, 2
          %s329 = scalar_lea.vmem [#allocation9], %s328
          %331 = dma.done %s326, 32
        $region60: #{tpu_custom_call.1} parent=55 // pred_fallthru
          _
      $region56: #{tpu_custom_call.1} parent=5 // pred_fallthru
        _
    $region6: #{tpu_custom_call.1} parent=1 // loop_footer
      %s30 = sadd.s32 1, %s26
    $region7: #{tpu_custom_call.1} parent=1 // loop_footer_branch
      %25 = sbr.rel target = $region3
    $region8: #{tpu_custom_call.1} parent=1 // loop_exit
      _
    %332 = vsyncpa [#allocation5], 1
    %s333 = scalar_lea.sflag [#allocation5], 1
    %334 = vsyncpa %s333, 1
    %335 = vsyncpa [#allocation8], 1
    %s336 = scalar_lea.sflag [#allocation8], 1
    %337 = vsyncpa %s336, 1
    %338 = vsyncpa [#allocation6], 1
    %s339 = scalar_lea.sflag [#allocation6], 1
    %340 = vsyncpa %s339, 1

</llo_original>
